<compile_context>
chip_gen: v7x
topology: tpu7x:2x2x1
jax: 0.10.0
libtpu: 0.0.40
codegen_flags: <defaults>
</compile_context>

<pallas_src>
import functools

import jax
import jax.numpy as jnp
from jax.experimental import pallas as pl
from jax.experimental.pallas import tpu as pltpu

_LANE = 128      # lane width: last-dim alignment
_SUBLANE = 8     # sublane: second-to-last dim alignment
_MIN_SPLIT_ROWS = 256   # only force >=2 row tiles when each tile gets >= this


def _round_up(x, m):
    return ((x + m - 1) // m) * m


def _cdiv(a, b):
    return (a + b - 1) // b


def _vmem_limit_bytes():
    """Generation-aware VMEM budget (leave ~25% headroom for the compiler)."""
    try:
        cap = pltpu.get_tpu_info().vmem_capacity_bytes
    except Exception:
        cap = 64 * 1024 * 1024   # conservative: v7x per-TC VMEM
    return max(int(cap * 3 // 4), 32 * 1024 * 1024)


def _choose_row_tiling(m, *, tm_target=512):
    """Pick (tm, m_pad, n_tiles): large MXU-friendly tiles, >=2 tiles when M
    is big enough (feeds both v7x TensorCores), bounded padded-row waste."""
    m_min = _round_up(max(m, _SUBLANE), _SUBLANE)
    n_tiles = _cdiv(m_min, tm_target)
    if n_tiles == 1 and m_min >= 2 * _MIN_SPLIT_ROWS:
        n_tiles = 2            # give v7x's two TCs something to split
    base = _cdiv(m_min, n_tiles)
    waste_budget = max(_SUBLANE, m // 8)          # <= ~12% padded rows
    tm = _round_up(base, _SUBLANE)
    m_pad = n_tiles * tm
    for align in (256, 128, _SUBLANE):            # prefer 256-row tiles
        cand_tm = _round_up(base, align)
        cand_pad = n_tiles * cand_tm
        if cand_pad - m <= waste_budget:
            tm, m_pad = cand_tm, cand_pad
            break
    return tm, m_pad, n_tiles


# ---------------------------------------------------------------------------
# Fused path: all layers in ONE pallas_call, weights VMEM-resident.
# ---------------------------------------------------------------------------
def _mlp_fused_kernel(x_ref, *refs, num_layers):
    """Fused MLP on one (tm, K_pad) row tile; intermediates never touch HBM."""
    o_ref = refs[-1]
    wb = refs[:-1]
    h = x_ref[...].astype(jnp.bfloat16)            # in-kernel f32->bf16 cast
    for i in range(num_layers):
        w = wb[2 * i][...]                         # bf16 (K_pad_i, N_pad_i)
        b = wb[2 * i + 1][...]                     # f32  (1, N_pad_i)
        y = jnp.dot(h, w, preferred_element_type=jnp.float32) + b
        if i < num_layers - 1:
            h = jnp.maximum(y, 0.0).astype(jnp.bfloat16)
        else:
            h = y
    o_ref[...] = h.astype(o_ref.dtype)


def _mlp_fused_call(x_in, padded_params, tm, *, vmem_limit, buffered_weights):
    m_pad, k_pad = x_in.shape
    n_out_pad = padded_params[-1][0].shape[1]
    num_layers = len(padded_params)

    # Invariant weights/biases: constant index_map, single-buffered.
    weight_kwargs = {"pipeline_mode": pl.Buffered(1)} if buffered_weights else {}

    in_specs = [pl.BlockSpec((tm, k_pad), lambda i: (i, 0))]
    args = [x_in]
    for w_p, b_p in padded_params:
        kp, np_ = w_p.shape
        in_specs.append(pl.BlockSpec((kp, np_), lambda i: (0, 0), **weight_kwargs))
        in_specs.append(pl.BlockSpec((1, np_), lambda i: (0, 0), **weight_kwargs))
        args.extend([w_p, b_p])

    flops = 2 * m_pad * sum(w.shape[0] * w.shape[1] for w, _ in padded_params)
    bytes_accessed = (
        x_in.size * x_in.dtype.itemsize
        + sum(w.size * w.dtype.itemsize + b.size * b.dtype.itemsize
              for w, b in padded_params)
        + m_pad * n_out_pad * 2)

    kernel = functools.partial(_mlp_fused_kernel, num_layers=num_layers)
    return pl.pallas_call(
        kernel,
        out_shape=jax.ShapeDtypeStruct((m_pad, n_out_pad), jnp.bfloat16),
        grid=(m_pad // tm,),
        in_specs=in_specs,
        out_specs=pl.BlockSpec((tm, n_out_pad), lambda i: (i, 0)),
        compiler_params=pltpu.CompilerParams(
            dimension_semantics=("parallel",),      # shard row tiles over TCs
            vmem_limit_bytes=vmem_limit),
        cost_estimate=pl.CostEstimate(
            flops=flops, transcendentals=0, bytes_accessed=bytes_accessed),
    )(*args)


# ---------------------------------------------------------------------------
# Fallback path: per-layer tiled matmul (M, N, K grid, f32 VMEM accumulator)
# for hidden dims whose weights do not fit the VMEM budget (e.g. v7x 64 MiB).
# ---------------------------------------------------------------------------
def _linear_kernel(x_ref, w_ref, b_ref, o_ref, acc_ref, *, apply_relu):
    k = pl.program_id(2)

    @pl.when(k == 0)
    def _():
        acc_ref[...] = jnp.zeros_like(acc_ref)

    acc_ref[...] += jnp.dot(x_ref[...].astype(jnp.bfloat16), w_ref[...],
                            preferred_element_type=jnp.float32)

    @pl.when(k == pl.num_programs(2) - 1)
    def _():
        y = acc_ref[...] + b_ref[...]
        if apply_relu:
            y = jnp.maximum(y, 0.0)
        o_ref[...] = y.astype(o_ref.dtype)


def _pick_tile(dim, target):
    if dim <= target:
        return dim
    for cand in (target, 512, 256, 128):
        if cand <= dim and dim % cand == 0:
            return cand
    return dim


def _mlp_layered_call(x_in, padded_params, tm, *, vmem_limit):
    h = x_in
    num_layers = len(padded_params)
    for layer_idx, (w_p, b_p) in enumerate(padded_params):
        k_dim, n_dim = w_p.shape
        tk = _pick_tile(k_dim, 512)
        tn = _pick_tile(n_dim, 512)
        m_pad = h.shape[0]
        kernel = functools.partial(_linear_kernel,
                                   apply_relu=layer_idx < num_layers - 1)
        h = pl.pallas_call(
            kernel,
            out_shape=jax.ShapeDtypeStruct((m_pad, n_dim), jnp.bfloat16),
            grid=(m_pad // tm, n_dim // tn, k_dim // tk),
            in_specs=[
                pl.BlockSpec((tm, tk), lambda i, j, k: (i, k)),
                pl.BlockSpec((tk, tn), lambda i, j, k: (k, j)),
                pl.BlockSpec((1, tn), lambda i, j, k: (0, j)),
            ],
            out_specs=pl.BlockSpec((tm, tn), lambda i, j, k: (i, j)),
            scratch_shapes=[pltpu.VMEM((tm, tn), jnp.float32)],
            compiler_params=pltpu.CompilerParams(
                dimension_semantics=("parallel", "parallel", "arbitrary"),
                vmem_limit_bytes=vmem_limit),
        )(h, w_p, b_p)
    return h


# ---------------------------------------------------------------------------
# Dispatcher
# ---------------------------------------------------------------------------
def _mlp_pallas(x2d, padded_params, output_dim, *, tm_target=512,
                force_layered=False):
    m_rows, k_in = x2d.shape
    k_pad = padded_params[0][0].shape[0]
    n_out_pad = padded_params[-1][0].shape[1]
    vmem_limit = _vmem_limit_bytes()

    tm, m_pad, _ = _choose_row_tiling(m_rows, tm_target=tm_target)

    # Feed x straight to the kernel when already aligned (DETR: input_dim=256,
    # M = batch*queries multiple of 8) -> no extra HBM pad/cast pass; the
    # kernel does the f32->bf16 cast.  Otherwise pad+cast is one fused op.
    if m_pad == m_rows and k_pad == k_in:
        x_in = x2d
    else:
        x_in = (jnp.zeros((m_pad, k_pad), jnp.bfloat16)
                .at[:m_rows, :k_in].set(x2d.astype(jnp.bfloat16)))

    # VMEM-residency estimate for the fused path: single-buffered weights +
    # double-buffered x/out tiles + live intermediate activations.
    weight_bytes = sum(w.size * w.dtype.itemsize + b.size * b.dtype.itemsize
                       for w, b in padded_params)
    max_dim = max(w.shape[1] for w, _ in padded_params)
    io_bytes = 2 * tm * k_pad * x_in.dtype.itemsize + 2 * tm * n_out_pad * 2
    act_bytes = 2 * tm * max_dim * 4
    fused_fits = (weight_bytes + io_bytes + act_bytes) <= int(0.7 * vmem_limit)

    if fused_fits and not force_layered:
        try:
            out_pad = _mlp_fused_call(x_in, padded_params, tm,
                                      vmem_limit=vmem_limit,
                                      buffered_weights=True)
        except Exception:
            # pipeline_mode=pl.Buffered(1) unsupported -> default buffering.
            out_pad = _mlp_fused_call(x_in, padded_params, tm,
                                      vmem_limit=vmem_limit,
                                      buffered_weights=False)
    else:
        out_pad = _mlp_layered_call(x_in, padded_params, tm,
                                    vmem_limit=vmem_limit)

    # Single fused slice + bf16->f32 cast.
    return out_pad[:m_rows, :output_dim].astype(jnp.float32)


class MLP:
    """JAX/Pallas port of DETR's MLP: num_layers Linear layers, ReLU between
    all but the last.  Weights are lane-padded bf16 (f32 accumulation)."""

    def __init__(self, input_dim, hidden_dim, output_dim, num_layers, key):
        self.num_layers = num_layers
        self.input_dim = input_dim
        self.output_dim = output_dim
        h = [hidden_dim] * (num_layers - 1)
        dims = list(zip([input_dim] + h, h + [output_dim]))

        self.params = []          # f32 originals (reference / export)
        self.padded_params = []   # lane-padded bf16 weights + f32 biases
        for (n, k) in dims:
            key, wk, bk = jax.random.split(key, 3)
            bound = 1.0 / (n ** 0.5)              # torch.nn.Linear init
            w = jax.random.uniform(wk, (n, k), jnp.float32, -bound, bound)
            b = jax.random.uniform(bk, (k,), jnp.float32, -bound, bound)
            self.params.append((w, b))

            n_pad = _round_up(n, _LANE)
            k_pad = _round_up(k, _LANE)
            w_pad = jnp.zeros((n_pad, k_pad), jnp.bfloat16).at[:n, :k].set(
                w.astype(jnp.bfloat16))
            b_pad = jnp.zeros((1, k_pad), jnp.float32).at[:, :k].set(b)
            self.padded_params.append((w_pad, b_pad))
        # TODO(synk): on v7x, fp8 weights with a per-output-channel scale on
        # the f32 accumulator would halve weight VMEM/DMA again.

    def __call__(self, x, force_layered=False):
        lead_shape = x.shape[:-1]
        x2d = x.reshape(-1, x.shape[-1])
        out2d = _mlp_pallas(x2d, self.padded_params, self.output_dim,
                            force_layered=force_layered)
        return out2d.reshape(*lead_shape, self.output_dim)


if __name__ == "__main__":
    key = jax.random.PRNGKey(0)
    key, xkey, pkey = jax.random.split(key, 3)

    batch, seq = 2, 8
    input_dim, hidden_dim, output_dim, num_layers = 16, 32, 4, 3

    x = jax.random.normal(xkey, (batch, seq, input_dim), jnp.float32)
    mlp = MLP(input_dim, hidden_dim, output_dim, num_layers, pkey)

    # Fused (weights VMEM-resident) path.
    out = jax.block_until_ready(mlp(x))

    # Reference: same math (bf16 operands, f32 accumulation, bf16 output).
    ref = x.reshape(-1, input_dim)
    for i, (w, b) in enumerate(mlp.params):
        ref = jnp.dot(ref.astype(jnp.bfloat16), w.astype(jnp.bfloat16),
                      preferred_element_type=jnp.float32) + b
        if i < num_layers - 1:
            ref = jnp.maximum(ref, 0.0)
    ref = ref.astype(jnp.bfloat16).astype(jnp.float32)
    ref = ref.reshape(batch, seq, output_dim)

    assert out.shape == (batch, seq, output_dim)
    err = float(jnp.max(jnp.abs(out - ref)))
    assert jnp.allclose(out, ref, atol=2e-2, rtol=2e-2), err

    # Also exercise the large-weight fallback path (per-layer K-tiled matmul).
    out_layered = jax.block_until_ready(mlp(x, force_layered=True))
    err_l = float(jnp.max(jnp.abs(out_layered - ref)))
    assert jnp.allclose(out_layered, ref, atol=2e-2, rtol=2e-2), err_l

    print("KERNEL_OK")
</pallas_src>

<mosaic_0001>
module attributes {stable_mosaic.version = 11 : i64} {
  func.func @_mlp_fused_kernel(%arg0: i32, %arg1: memref<16x128xbf16, #tpu.memory_space<vmem>>, %arg2: memref<128x128xbf16, #tpu.memory_space<vmem>>, %arg3: memref<1x128xf32, #tpu.memory_space<vmem>>, %arg4: memref<128x128xbf16, #tpu.memory_space<vmem>>, %arg5: memref<1x128xf32, #tpu.memory_space<vmem>>, %arg6: memref<128x128xbf16, #tpu.memory_space<vmem>>, %arg7: memref<1x128xf32, #tpu.memory_space<vmem>>, %arg8: memref<16x128xbf16, #tpu.memory_space<vmem>>) attributes {dimension_semantics = [#tpu.dimension_semantics<parallel>], iteration_bounds = array<i64: 1>, scalar_prefetch = 0 : i64, scratch_operands = 0 : i64, tpu.core_type = #tpu.core_type<tc>, window_params = [{transform_indices = @transform_0, window_bounds = array<i64: 16, 128>}, {pipeline_mode = #tpu.pipeline_mode<synchronous>, transform_indices = @transform_1, window_bounds = array<i64: 128, 128>}, {pipeline_mode = #tpu.pipeline_mode<synchronous>, transform_indices = @transform_2, window_bounds = array<i64: 1, 128>}, {pipeline_mode = #tpu.pipeline_mode<synchronous>, transform_indices = @transform_3, window_bounds = array<i64: 128, 128>}, {pipeline_mode = #tpu.pipeline_mode<synchronous>, transform_indices = @transform_4, window_bounds = array<i64: 1, 128>}, {pipeline_mode = #tpu.pipeline_mode<synchronous>, transform_indices = @transform_5, window_bounds = array<i64: 128, 128>}, {pipeline_mode = #tpu.pipeline_mode<synchronous>, transform_indices = @transform_6, window_bounds = array<i64: 1, 128>}, {transform_indices = @transform_7, window_bounds = array<i64: 16, 128>}]} {
    %c0 = arith.constant 0 : index
    %c0_0 = arith.constant 0 : index
    %0 = vector.load %arg1[%c0, %c0_0] : memref<16x128xbf16, #tpu.memory_space<vmem>>, vector<16x128xbf16>
    %c0_1 = arith.constant 0 : index
    %c0_2 = arith.constant 0 : index
    %1 = vector.load %arg2[%c0_1, %c0_2] : memref<128x128xbf16, #tpu.memory_space<vmem>>, vector<128x128xbf16>
    %c0_3 = arith.constant 0 : index
    %c0_4 = arith.constant 0 : index
    %2 = vector.load %arg3[%c0_3, %c0_4] : memref<1x128xf32, #tpu.memory_space<vmem>>, vector<1x128xf32>
    %cst = arith.constant dense<0.000000e+00> : vector<16x128xf32>
    %3 = tpu.matmul %0, %1, %cst {dimension_numbers = #tpu.dot_dimension_numbers<[1], [0], [0], [1], [0, 0, 1, 1], [], []>} : vector<16x128xbf16>, vector<128x128xbf16>, vector<16x128xf32> -> vector<16x128xf32>
    %4 = vector.broadcast %2 : vector<1x128xf32> to vector<16x128xf32>
    %5 = arith.addf %3, %4 : vector<16x128xf32>
    %cst_5 = arith.constant 0.000000e+00 : f32
    %6 = vector.broadcast %cst_5 : f32 to vector<16x128xf32>
    %7 = arith.maximumf %5, %6 : vector<16x128xf32>
    %8 = arith.truncf %7 : vector<16x128xf32> to vector<16x128xbf16>
    %c0_6 = arith.constant 0 : index
    %c0_7 = arith.constant 0 : index
    %9 = vector.load %arg4[%c0_6, %c0_7] : memref<128x128xbf16, #tpu.memory_space<vmem>>, vector<128x128xbf16>
    %c0_8 = arith.constant 0 : index
    %c0_9 = arith.constant 0 : index
    %10 = vector.load %arg5[%c0_8, %c0_9] : memref<1x128xf32, #tpu.memory_space<vmem>>, vector<1x128xf32>
    %cst_10 = arith.constant dense<0.000000e+00> : vector<16x128xf32>
    %11 = tpu.matmul %8, %9, %cst_10 {dimension_numbers = #tpu.dot_dimension_numbers<[1], [0], [0], [1], [0, 0, 1, 1], [], []>} : vector<16x128xbf16>, vector<128x128xbf16>, vector<16x128xf32> -> vector<16x128xf32>
    %12 = vector.broadcast %10 : vector<1x128xf32> to vector<16x128xf32>
    %13 = arith.addf %11, %12 : vector<16x128xf32>
    %cst_11 = arith.constant 0.000000e+00 : f32
    %14 = vector.broadcast %cst_11 : f32 to vector<16x128xf32>
    %15 = arith.maximumf %13, %14 : vector<16x128xf32>
    %16 = arith.truncf %15 : vector<16x128xf32> to vector<16x128xbf16>
    %c0_12 = arith.constant 0 : index
    %c0_13 = arith.constant 0 : index
    %17 = vector.load %arg6[%c0_12, %c0_13] : memref<128x128xbf16, #tpu.memory_space<vmem>>, vector<128x128xbf16>
    %c0_14 = arith.constant 0 : index
    %c0_15 = arith.constant 0 : index
    %18 = vector.load %arg7[%c0_14, %c0_15] : memref<1x128xf32, #tpu.memory_space<vmem>>, vector<1x128xf32>
    %cst_16 = arith.constant dense<0.000000e+00> : vector<16x128xf32>
    %19 = tpu.matmul %16, %17, %cst_16 {dimension_numbers = #tpu.dot_dimension_numbers<[1], [0], [0], [1], [0, 0, 1, 1], [], []>} : vector<16x128xbf16>, vector<128x128xbf16>, vector<16x128xf32> -> vector<16x128xf32>
    %20 = vector.broadcast %18 : vector<1x128xf32> to vector<16x128xf32>
    %21 = arith.addf %19, %20 : vector<16x128xf32>
    %22 = arith.truncf %21 : vector<16x128xf32> to vector<16x128xbf16>
    %c0_17 = arith.constant 0 : index
    %c0_18 = arith.constant 0 : index
    %23 = vector.load %arg8[%c0_17, %c0_18] : memref<16x128xbf16, #tpu.memory_space<vmem>>, vector<16x128xbf16>
    tpu.vector_store %arg8[%c0_17, %c0_18], %22 {strides = array<i32>} : memref<16x128xbf16, #tpu.memory_space<vmem>>, vector<16x128xbf16>,
    return
  }
  func.func @transform_0(%arg0: i32) -> (i32, i32) {
    %c0_i32 = arith.constant 0 : i32
    %c0_i32_0 = arith.constant 0 : i32
    return %arg0, %c0_i32 : i32, i32
  }
  func.func @transform_1(%arg0: i32) -> (i32, i32) {
    %c0_i32 = arith.constant 0 : i32
    %c0_i32_0 = arith.constant 0 : i32
    %c0_i32_1 = arith.constant 0 : i32
    return %c0_i32, %c0_i32_0 : i32, i32
  }
  func.func @transform_2(%arg0: i32) -> (i32, i32) {
    %c0_i32 = arith.constant 0 : i32
    %c0_i32_0 = arith.constant 0 : i32
    %c0_i32_1 = arith.constant 0 : i32
    return %c0_i32, %c0_i32_0 : i32, i32
  }
  func.func @transform_3(%arg0: i32) -> (i32, i32) {
    %c0_i32 = arith.constant 0 : i32
    %c0_i32_0 = arith.constant 0 : i32
    %c0_i32_1 = arith.constant 0 : i32
    return %c0_i32, %c0_i32_0 : i32, i32
  }
  func.func @transform_4(%arg0: i32) -> (i32, i32) {
    %c0_i32 = arith.constant 0 : i32
    %c0_i32_0 = arith.constant 0 : i32
    %c0_i32_1 = arith.constant 0 : i32
    return %c0_i32, %c0_i32_0 : i32, i32
  }
  func.func @transform_5(%arg0: i32) -> (i32, i32) {
    %c0_i32 = arith.constant 0 : i32
    %c0_i32_0 = arith.constant 0 : i32
    %c0_i32_1 = arith.constant 0 : i32
    return %c0_i32, %c0_i32_0 : i32, i32
  }
  func.func @transform_6(%arg0: i32) -> (i32, i32) {
    %c0_i32 = arith.constant 0 : i32
    %c0_i32_0 = arith.constant 0 : i32
    %c0_i32_1 = arith.constant 0 : i32
    return %c0_i32, %c0_i32_0 : i32, i32
  }
  func.func @transform_7(%arg0: i32) -> (i32, i32) {
    %c0_i32 = arith.constant 0 : i32
    %c0_i32_0 = arith.constant 0 : i32
    return %arg0, %c0_i32 : i32, i32
  }
}

module attributes {stable_mosaic.version = 11 : i64} {
  func.func @_mlp_fused_kernel(%arg0: i32, %arg1: memref<16x128xbf16, #tpu.memory_space<vmem>>, %arg2: memref<128x128xbf16, #tpu.memory_space<vmem>>, %arg3: memref<1x128xf32, #tpu.memory_space<vmem>>, %arg4: memref<128x128xbf16, #tpu.memory_space<vmem>>, %arg5: memref<1x128xf32, #tpu.memory_space<vmem>>, %arg6: memref<128x128xbf16, #tpu.memory_space<vmem>>, %arg7: memref<1x128xf32, #tpu.memory_space<vmem>>, %arg8: memref<16x128xbf16, #tpu.memory_space<vmem>>) attributes {dimension_semantics = [#tpu.dimension_semantics<parallel>], iteration_bounds = array<i64: 1>, scalar_prefetch = 0 : i64, scratch_operands = 0 : i64, tpu.core_type = #tpu.core_type<tc>, window_params = [{transform_indices = @transform_0, window_bounds = array<i64: 16, 128>}, {pipeline_mode = #tpu.pipeline_mode<synchronous>, transform_indices = @transform_1, window_bounds = array<i64: 128, 128>}, {pipeline_mode = #tpu.pipeline_mode<synchronous>, transform_indices = @transform_2, window_bounds = array<i64: 1, 128>}, {pipeline_mode = #tpu.pipeline_mode<synchronous>, transform_indices = @transform_3, window_bounds = array<i64: 128, 128>}, {pipeline_mode = #tpu.pipeline_mode<synchronous>, transform_indices = @transform_4, window_bounds = array<i64: 1, 128>}, {pipeline_mode = #tpu.pipeline_mode<synchronous>, transform_indices = @transform_5, window_bounds = array<i64: 128, 128>}, {pipeline_mode = #tpu.pipeline_mode<synchronous>, transform_indices = @transform_6, window_bounds = array<i64: 1, 128>}, {transform_indices = @transform_7, window_bounds = array<i64: 16, 128>}]} {
    %c0 = arith.constant 0 : index
    %c0_0 = arith.constant 0 : index
    %0 = vector.load %arg1[%c0, %c0_0] : memref<16x128xbf16, #tpu.memory_space<vmem>>, vector<16x128xbf16>
    %c0_1 = arith.constant 0 : index
    %c0_2 = arith.constant 0 : index
    %1 = vector.load %arg2[%c0_1, %c0_2] : memref<128x128xbf16, #tpu.memory_space<vmem>>, vector<128x128xbf16>
    %c0_3 = arith.constant 0 : index
    %c0_4 = arith.constant 0 : index
    %2 = vector.load %arg3[%c0_3, %c0_4] : memref<1x128xf32, #tpu.memory_space<vmem>>, vector<1x128xf32>
    %cst = arith.constant dense<0.000000e+00> : vector<16x128xf32>
    %3 = tpu.matmul %0, %1, %cst {dimension_numbers = #tpu.dot_dimension_numbers<[1], [0], [0], [1], [0, 0, 1, 1], [], []>} : vector<16x128xbf16>, vector<128x128xbf16>, vector<16x128xf32> -> vector<16x128xf32>
    %4 = vector.broadcast %2 : vector<1x128xf32> to vector<16x128xf32>
    %5 = arith.addf %3, %4 : vector<16x128xf32>
    %cst_5 = arith.constant 0.000000e+00 : f32
    %6 = vector.broadcast %cst_5 : f32 to vector<16x128xf32>
    %7 = arith.maximumf %5, %6 : vector<16x128xf32>
    %8 = arith.truncf %7 : vector<16x128xf32> to vector<16x128xbf16>
    %c0_6 = arith.constant 0 : index
    %c0_7 = arith.constant 0 : index
    %9 = vector.load %arg4[%c0_6, %c0_7] : memref<128x128xbf16, #tpu.memory_space<vmem>>, vector<128x128xbf16>
    %c0_8 = arith.constant 0 : index
    %c0_9 = arith.constant 0 : index
    %10 = vector.load %arg5[%c0_8, %c0_9] : memref<1x128xf32, #tpu.memory_space<vmem>>, vector<1x128xf32>
    %cst_10 = arith.constant dense<0.000000e+00> : vector<16x128xf32>
    %11 = tpu.matmul %8, %9, %cst_10 {dimension_numbers = #tpu.dot_dimension_numbers<[1], [0], [0], [1], [0, 0, 1, 1], [], []>} : vector<16x128xbf16>, vector<128x128xbf16>, vector<16x128xf32> -> vector<16x128xf32>
    %12 = vector.broadcast %10 : vector<1x128xf32> to vector<16x128xf32>
    %13 = arith.addf %11, %12 : vector<16x128xf32>
    %cst_11 = arith.constant 0.000000e+00 : f32
    %14 = vector.broadcast %cst_11 : f32 to vector<16x128xf32>
    %15 = arith.maximumf %13, %14 : vector<16x128xf32>
    %16 = arith.truncf %15 : vector<16x128xf32> to vector<16x128xbf16>
    %c0_12 = arith.constant 0 : index
    %c0_13 = arith.constant 0 : index
    %17 = vector.load %arg6[%c0_12, %c0_13] : memref<128x128xbf16, #tpu.memory_space<vmem>>, vector<128x128xbf16>
    %c0_14 = arith.constant 0 : index
    %c0_15 = arith.constant 0 : index
    %18 = vector.load %arg7[%c0_14, %c0_15] : memref<1x128xf32, #tpu.memory_space<vmem>>, vector<1x128xf32>
    %cst_16 = arith.constant dense<0.000000e+00> : vector<16x128xf32>
    %19 = tpu.matmul %16, %17, %cst_16 {dimension_numbers = #tpu.dot_dimension_numbers<[1], [0], [0], [1], [0, 0, 1, 1], [], []>} : vector<16x128xbf16>, vector<128x128xbf16>, vector<16x128xf32> -> vector<16x128xf32>
    %20 = vector.broadcast %18 : vector<1x128xf32> to vector<16x128xf32>
    %21 = arith.addf %19, %20 : vector<16x128xf32>
    %22 = arith.truncf %21 : vector<16x128xf32> to vector<16x128xbf16>
    %c0_17 = arith.constant 0 : index
    %c0_18 = arith.constant 0 : index
    %23 = vector.load %arg8[%c0_17, %c0_18] : memref<16x128xbf16, #tpu.memory_space<vmem>>, vector<16x128xbf16>
    tpu.vector_store %arg8[%c0_17, %c0_18], %22 {strides = array<i32>} : memref<16x128xbf16, #tpu.memory_space<vmem>>, vector<16x128xbf16>,
    return
  }
  func.func @transform_0(%arg0: i32) -> (i32, i32) {
    %c0_i32 = arith.constant 0 : i32
    %c0_i32_0 = arith.constant 0 : i32
    return %arg0, %c0_i32 : i32, i32
  }
  func.func @transform_1(%arg0: i32) -> (i32, i32) {
    %c0_i32 = arith.constant 0 : i32
    %c0_i32_0 = arith.constant 0 : i32
    %c0_i32_1 = arith.constant 0 : i32
    return %c0_i32, %c0_i32_0 : i32, i32
  }
  func.func @transform_2(%arg0: i32) -> (i32, i32) {
    %c0_i32 = arith.constant 0 : i32
    %c0_i32_0 = arith.constant 0 : i32
    %c0_i32_1 = arith.constant 0 : i32
    return %c0_i32, %c0_i32_0 : i32, i32
  }
  func.func @transform_3(%arg0: i32) -> (i32, i32) {
    %c0_i32 = arith.constant 0 : i32
    %c0_i32_0 = arith.constant 0 : i32
    %c0_i32_1 = arith.constant 0 : i32
    return %c0_i32, %c0_i32_0 : i32, i32
  }
  func.func @transform_4(%arg0: i32) -> (i32, i32) {
    %c0_i32 = arith.constant 0 : i32
    %c0_i32_0 = arith.constant 0 : i32
    %c0_i32_1 = arith.constant 0 : i32
    return %c0_i32, %c0_i32_0 : i32, i32
  }
  func.func @transform_5(%arg0: i32) -> (i32, i32) {
    %c0_i32 = arith.constant 0 : i32
    %c0_i32_0 = arith.constant 0 : i32
    %c0_i32_1 = arith.constant 0 : i32
    return %c0_i32, %c0_i32_0 : i32, i32
  }
  func.func @transform_6(%arg0: i32) -> (i32, i32) {
    %c0_i32 = arith.constant 0 : i32
    %c0_i32_0 = arith.constant 0 : i32
    %c0_i32_1 = arith.constant 0 : i32
    return %c0_i32, %c0_i32_0 : i32, i32
  }
  func.func @transform_7(%arg0: i32) -> (i32, i32) {
    %c0_i32 = arith.constant 0 : i32
    %c0_i32_0 = arith.constant 0 : i32
    return %arg0, %c0_i32 : i32, i32
  }
}

</mosaic_0001>

<llo_original>
// kernel: tpu_custom_call.1
$region0: #{tpu_custom_call.1}
  #allocation0 [shape = 'u32[]', space=smem, size = 0x4, offset = 0x4, fixed_abs, tag = 'smem constant byte address 0x4 - core index']
  #allocation1 [shape = 'u32[144,128]{1,0:T(1,128)}', space=vmem, size = 0x12000, scoped, tag = 'internal scratch']
  %s0 = inlined_call_operand.hbm [shape: bf16[16,128], index: 0, kind: input, shape index: {}]
  %s1 = inlined_call_operand.hbm [shape: bf16[128,128], index: 1, kind: input, shape index: {}]
  %s2 = inlined_call_operand.vmem [shape: f32[1,128], index: 2, kind: input, shape index: {}]
  %s3 = inlined_call_operand.hbm [shape: bf16[128,128], index: 3, kind: input, shape index: {}]
  %s4 = inlined_call_operand.vmem [shape: f32[1,128], index: 4, kind: input, shape index: {}]
  %s5 = inlined_call_operand.hbm [shape: bf16[128,128], index: 5, kind: input, shape index: {}]
  %s6 = inlined_call_operand.vmem [shape: f32[1,128], index: 6, kind: input, shape index: {}]
  %s7 = inlined_call_operand.hbm [shape: bf16[16,128], index: 7, kind: output, shape index: {}]
  %s8 = sld [smem:[#allocation0]]
  $region54: #{tpu_custom_call.1} parent=0
    _
  %s10 = ssub.s32 1, %s8
  %s11 = scalar_select 0, %s10, %s8
  $region1: #{tpu_custom_call.1} parent=0
    #allocation2 [shape = 'u8[4096]{0}', space=vmem, size = 0x1000, scoped, tag = 'input window, operand 0, single buffered']
    #allocation3 [shape = 's32[1]{0}', space=sflag, size = 0x4, scoped, tag = 'scoped memory for tpu_custom_call.1']
    #allocation4 [shape = 's32[1]{0}', space=sflag, size = 0x4, scoped, tag = 'scoped memory for tpu_custom_call.1']
    #allocation5 [shape = 'u8[32768]{0}', space=vmem, size = 0x8000, scoped, tag = 'input window, operand 1, single buffered']
    #allocation6 [shape = 's32[1]{0}', space=sflag, size = 0x4, scoped, tag = 'scoped memory for tpu_custom_call.1']
    #allocation7 [shape = 'u8[32768]{0}', space=vmem, size = 0x8000, scoped, tag = 'input window, operand 3, single buffered']
    #allocation8 [shape = 'u8[32768]{0}', space=vmem, size = 0x8000, scoped, tag = 'input window, operand 5, single buffered']
    #allocation9 [shape = 's32[1]{0}', space=sflag, size = 0x4, scoped, tag = 'scoped memory for tpu_custom_call.1']
    #allocation10 [shape = 'u8[4096]{0}', space=vmem, size = 0x1000, scoped, tag = 'output window, operand 0, single buffered']
    %12 = vsyncpa [#allocation3], 0
    %13 = vsyncpa [#allocation6], 0
    %14 = vsyncpa [#allocation9], 0
    %15 = vsyncpa [#allocation4], 0
    // Predicated region
    $region2: #{tpu_custom_call.1} parent=1 // pred_check
      _
    $region3: #{tpu_custom_call.1} parent=1 // pred_check_branch
      %17 = sbr.rel (0) target = $region5
    $region4: #{tpu_custom_call.1} parent=1 // pred_region
      %s19 = ssub.s32 128, 128
      %20 = vsyncadd [#allocation3], %s19
      %s21 = sshll.u32 [#allocation2], 4
      %s22 = int_to_ptr.vmem [resolvable:$true] %s21
      %27 = dma.hbm_to_vmem [thread:$0]  %s0, 128, %s22, [#allocation3], 64, 64, 4
    $region5: #{tpu_custom_call.1} parent=1 // pred_fallthru
      _
    // Predicated region
    $region6: #{tpu_custom_call.1} parent=1 // pred_check
      _
    $region7: #{tpu_custom_call.1} parent=1 // pred_check_branch
      %29 = sbr.rel (0) target = $region9
    $region8: #{tpu_custom_call.1} parent=1 // pred_region
      %s31 = ssub.s32 1024, 1024
      %32 = vsyncadd [#allocation6], %s31
      %s33 = sshll.u32 [#allocation5], 4
      %s34 = int_to_ptr.vmem [resolvable:$true] %s33
      %39 = dma.hbm_to_vmem [thread:$0]  %s1, 1024, %s34, [#allocation6], 64, 64, 4
    $region9: #{tpu_custom_call.1} parent=1 // pred_fallthru
      _
    // Predicated region
    $region10: #{tpu_custom_call.1} parent=1 // pred_check
      _
    $region11: #{tpu_custom_call.1} parent=1 // pred_check_branch
      %41 = sbr.rel (0) target = $region13
    $region12: #{tpu_custom_call.1} parent=1 // pred_region
      _
    $region13: #{tpu_custom_call.1} parent=1 // pred_fallthru
      _
    // Predicated region
    $region14: #{tpu_custom_call.1} parent=1 // pred_check
      _
    $region15: #{tpu_custom_call.1} parent=1 // pred_check_branch
      %43 = sbr.rel (0) target = $region17
    $region16: #{tpu_custom_call.1} parent=1 // pred_region
      %s45 = ssub.s32 1024, 1024
      %46 = vsyncadd [#allocation6], %s45
      %s47 = sshll.u32 [#allocation7], 4
      %s48 = int_to_ptr.vmem [resolvable:$true] %s47
      %53 = dma.hbm_to_vmem [thread:$0]  %s3, 1024, %s48, [#allocation6], 64, 64, 4
    $region17: #{tpu_custom_call.1} parent=1 // pred_fallthru
      _
    // Predicated region
    $region18: #{tpu_custom_call.1} parent=1 // pred_check
      _
    $region19: #{tpu_custom_call.1} parent=1 // pred_check_branch
      %55 = sbr.rel (0) target = $region21
    $region20: #{tpu_custom_call.1} parent=1 // pred_region
      _
    $region21: #{tpu_custom_call.1} parent=1 // pred_fallthru
      _
    // Predicated region
    $region22: #{tpu_custom_call.1} parent=1 // pred_check
      _
    $region23: #{tpu_custom_call.1} parent=1 // pred_check_branch
      %57 = sbr.rel (0) target = $region25
    $region24: #{tpu_custom_call.1} parent=1 // pred_region
      %s59 = ssub.s32 1024, 1024
      %60 = vsyncadd [#allocation9], %s59
      %s61 = sshll.u32 [#allocation8], 4
      %s62 = int_to_ptr.vmem [resolvable:$true] %s61
      %67 = dma.hbm_to_vmem [thread:$0]  %s5, 1024, %s62, [#allocation9], 64, 64, 4
    $region25: #{tpu_custom_call.1} parent=1 // pred_fallthru
      _
    // Predicated region
    $region26: #{tpu_custom_call.1} parent=1 // pred_check
      _
    $region27: #{tpu_custom_call.1} parent=1 // pred_check_branch
      %69 = sbr.rel (0) target = $region29
    $region28: #{tpu_custom_call.1} parent=1 // pred_region
      _
    $region29: #{tpu_custom_call.1} parent=1 // pred_fallthru
      _
    // Predicated region
    $region30: #{tpu_custom_call.1} parent=1 // pred_check
      _
    $region31: #{tpu_custom_call.1} parent=1 // pred_check_branch
      %71 = sbr.rel (0) target = $region33
    $region32: #{tpu_custom_call.1} parent=1 // pred_region
      %72 = dma.done [#allocation3], 128
    $region33: #{tpu_custom_call.1} parent=1 // pred_fallthru
      _
    // Predicated region
    $region34: #{tpu_custom_call.1} parent=1 // pred_check
      _
    $region35: #{tpu_custom_call.1} parent=1 // pred_check_branch
      %74 = sbr.rel (0) target = $region37
    $region36: #{tpu_custom_call.1} parent=1 // pred_region
      %75 = dma.done [#allocation6], 1024
    $region37: #{tpu_custom_call.1} parent=1 // pred_fallthru
      _
    // Predicated region
    $region38: #{tpu_custom_call.1} parent=1 // pred_check
      _
    $region39: #{tpu_custom_call.1} parent=1 // pred_check_branch
      %77 = sbr.rel (0) target = $region41
    $region40: #{tpu_custom_call.1} parent=1 // pred_region
      %78 = dma.done [#allocation6], 1024
    $region41: #{tpu_custom_call.1} parent=1 // pred_fallthru
      _
    // Predicated region
    $region42: #{tpu_custom_call.1} parent=1 // pred_check
      _
    $region43: #{tpu_custom_call.1} parent=1 // pred_check_branch
      %80 = sbr.rel (0) target = $region45
    $region44: #{tpu_custom_call.1} parent=1 // pred_region
      %81 = dma.done [#allocation9], 1024
    $region45: #{tpu_custom_call.1} parent=1 // pred_fallthru
      _
    %v83 = vld [vmem:[#allocation2] sm:$0xf]
    %v84 = vld [vmem:[#allocation2 + $0x4] sm:$0xf]
    %v85 = vld [vmem:[#allocation5] sm:$0xf]
    %v86 = vld [vmem:[#allocation5 + $0x4] sm:$0xf]
    %v87 = vld [vmem:[#allocation5 + $0x8] sm:$0xf]
    %v88 = vld [vmem:[#allocation5 + $0xc] sm:$0xf]
    %v89 = vld [vmem:[#allocation5 + $0x10] sm:$0xf]
    %v90 = vld [vmem:[#allocation5 + $0x14] sm:$0xf]
    %v91 = vld [vmem:[#allocation5 + $0x18] sm:$0xf]
    %v92 = vld [vmem:[#allocation5 + $0x1c] sm:$0xf]
    %v93 = vld [vmem:[#allocation5 + $0x20] sm:$0xf]
    %v94 = vld [vmem:[#allocation5 + $0x24] sm:$0xf]
    %v95 = vld [vmem:[#allocation5 + $0x28] sm:$0xf]
    %v96 = vld [vmem:[#allocation5 + $0x2c] sm:$0xf]
    %v97 = vld [vmem:[#allocation5 + $0x30] sm:$0xf]
    %v98 = vld [vmem:[#allocation5 + $0x34] sm:$0xf]
    %v99 = vld [vmem:[#allocation5 + $0x38] sm:$0xf]
    %v100 = vld [vmem:[#allocation5 + $0x3c] sm:$0xf]
    %v101 = vld [vmem:[%s2] sm:$0x1]
    %v103 = vlaneseq
    %v104 = vshrl.u32 %v103, 7
    %v105 = vsub.s32 0, %v104
    %v106 = vrot.slane %v101, %v105
    %v110 = vunpack.c.l.b16 %v83
    %v111 = vunpack.c.l.b16 %v84
    %v112 = vpack.c.b16 %v111, %v110
    %v130 = vunpack.c.l.b16 %v85
    %v131 = vunpack.c.l.b16 %v86
    %v132 = vunpack.c.l.b16 %v87
    %v133 = vunpack.c.l.b16 %v88
    %v134 = vunpack.c.l.b16 %v89
    %v135 = vunpack.c.l.b16 %v90
    %v136 = vunpack.c.l.b16 %v91
    %v137 = vunpack.c.l.b16 %v92
    %v138 = vunpack.c.l.b16 %v93
    %v139 = vunpack.c.l.b16 %v94
    %v140 = vunpack.c.l.b16 %v95
    %v141 = vunpack.c.l.b16 %v96
    %v142 = vunpack.c.l.b16 %v97
    %v143 = vunpack.c.l.b16 %v98
    %v144 = vunpack.c.l.b16 %v99
    %v145 = vunpack.c.l.b16 %v100
    %v146 = vpack.c.b16 %v131, %v130
    %v147 = vpack.c.b16 %v133, %v132
    %v148 = vpack.c.b16 %v135, %v134
    %v149 = vpack.c.b16 %v137, %v136
    %v150 = vpack.c.b16 %v139, %v138
    %v151 = vpack.c.b16 %v141, %v140
    %v152 = vpack.c.b16 %v143, %v142
    %v153 = vpack.c.b16 %v145, %v144
    %162 = vmatprep.subr.bf16.mxu0 0
    %163 = vmatpush1.bf16.msra.mxu0 %v146
    %164 = vmatprep.subr.bf16.mxu0 0
    %165 = vmatpush1.bf16.msra.mxu0 %v147
    %166 = vmatprep.subr.bf16.mxu0 0
    %167 = vmatpush1.bf16.msra.mxu0 %v148
    %168 = vmatprep.subr.bf16.mxu0 0
    %169 = vmatpush1.bf16.msra.mxu0 %v149
    %170 = vmatprep.subr.bf16.mxu0 0
    %171 = vmatpush1.bf16.msra.mxu0 %v150
    %172 = vmatprep.subr.bf16.mxu0 0
    %173 = vmatpush1.bf16.msra.mxu0 %v151
    %174 = vmatprep.subr.bf16.mxu0 0
    %175 = vmatpush1.bf16.msra.mxu0 %v152
    %176 = vmatprep.subr.bf16.mxu0 0
    %177 = vmatpush1.bf16.msra.mxu0 %v153
    %178 = vmatprep.subr.bf16.mxu0 0
    %179 = vmatpush1.bf16.msra.mxu0 0
    %180 = vmatprep.subr.bf16.mxu0 0
    %181 = vmatpush1.bf16.msra.mxu0 0
    %182 = vmatprep.subr.bf16.mxu0 0
    %183 = vmatpush1.bf16.msra.mxu0 0
    %184 = vmatprep.subr.bf16.mxu0 0
    %185 = vmatpush1.bf16.msra.mxu0 0
    %186 = vmatprep.subr.bf16.mxu0 0
    %187 = vmatpush1.bf16.msra.mxu0 0
    %188 = vmatprep.subr.bf16.mxu0 0
    %189 = vmatpush1.bf16.msra.mxu0 0
    %190 = vmatprep.subr.bf16.mxu0 0
    %191 = vmatpush1.bf16.msra.mxu0 0
    %192 = vmatprep.subr.bf16.mxu0 0
    %193 = vmatpush1.bf16.msra.mxu0 0
    %194 = vmatprep.mubr.bf16.mxu0 0
    %195 = vmatmul.mubr.bf16.gmra.mrb[0].mxu0 %v112
    %v196 = vpop.f32.mrb[0].mxu0
    %v197 = vadd.f32 %v106, %v196
    %v198 = vpop.f32.mrb[0].mxu0
    %v199 = vpop.f32.mrb[0].mxu0
    %v200 = vadd.f32 %v106, %v199
    %v201 = vpop.f32.mrb[0].mxu0
    %202 = vdwg.mxu0
    %v203 = vmax.f32 %v197, 0.0
    %v204 = vmax.f32 %v200, 0.0
    %v205 = vpack.c.bf16 %v204, %v203
    %v206 = vld [vmem:[#allocation7] sm:$0xf]
    %v207 = vld [vmem:[#allocation7 + $0x4] sm:$0xf]
    %v208 = vld [vmem:[#allocation7 + $0x8] sm:$0xf]
    %v209 = vld [vmem:[#allocation7 + $0xc] sm:$0xf]
    %v210 = vld [vmem:[#allocation7 + $0x10] sm:$0xf]
    %v211 = vld [vmem:[#allocation7 + $0x14] sm:$0xf]
    %v212 = vld [vmem:[#allocation7 + $0x18] sm:$0xf]
    %v213 = vld [vmem:[#allocation7 + $0x1c] sm:$0xf]
    %v214 = vld [vmem:[#allocation7 + $0x20] sm:$0xf]
    %v215 = vld [vmem:[#allocation7 + $0x24] sm:$0xf]
    %v216 = vld [vmem:[#allocation7 + $0x28] sm:$0xf]
    %v217 = vld [vmem:[#allocation7 + $0x2c] sm:$0xf]
    %v218 = vld [vmem:[#allocation7 + $0x30] sm:$0xf]
    %v219 = vld [vmem:[#allocation7 + $0x34] sm:$0xf]
    %v220 = vld [vmem:[#allocation7 + $0x38] sm:$0xf]
    %v221 = vld [vmem:[#allocation7 + $0x3c] sm:$0xf]
    %v222 = vld [vmem:[%s4] sm:$0x1]
    %v224 = vlaneseq
    %v225 = vshrl.u32 %v224, 7
    %v226 = vsub.s32 0, %v225
    %v227 = vrot.slane %v222, %v226
    %v245 = vunpack.c.l.b16 %v206
    %v246 = vunpack.c.l.b16 %v207
    %v247 = vunpack.c.l.b16 %v208
    %v248 = vunpack.c.l.b16 %v209
    %v249 = vunpack.c.l.b16 %v210
    %v250 = vunpack.c.l.b16 %v211
    %v251 = vunpack.c.l.b16 %v212
    %v252 = vunpack.c.l.b16 %v213
    %v253 = vunpack.c.l.b16 %v214
    %v254 = vunpack.c.l.b16 %v215
    %v255 = vunpack.c.l.b16 %v216
    %v256 = vunpack.c.l.b16 %v217
    %v257 = vunpack.c.l.b16 %v218
    %v258 = vunpack.c.l.b16 %v219
    %v259 = vunpack.c.l.b16 %v220
    %v260 = vunpack.c.l.b16 %v221
    %v261 = vpack.c.b16 %v246, %v245
    %v262 = vpack.c.b16 %v248, %v247
    %v263 = vpack.c.b16 %v250, %v249
    %v264 = vpack.c.b16 %v252, %v251
    %v265 = vpack.c.b16 %v254, %v253
    %v266 = vpack.c.b16 %v256, %v255
    %v267 = vpack.c.b16 %v258, %v257
    %v268 = vpack.c.b16 %v260, %v259
    %277 = vmatprep.subr.bf16.mxu0 0
    %278 = vmatpush1.bf16.msra.mxu0 %v261
    %279 = vmatprep.subr.bf16.mxu0 0
    %280 = vmatpush1.bf16.msra.mxu0 %v262
    %281 = vmatprep.subr.bf16.mxu0 0
    %282 = vmatpush1.bf16.msra.mxu0 %v263
    %283 = vmatprep.subr.bf16.mxu0 0
    %284 = vmatpush1.bf16.msra.mxu0 %v264
    %285 = vmatprep.subr.bf16.mxu0 0
    %286 = vmatpush1.bf16.msra.mxu0 %v265
    %287 = vmatprep.subr.bf16.mxu0 0
    %288 = vmatpush1.bf16.msra.mxu0 %v266
    %289 = vmatprep.subr.bf16.mxu0 0
    %290 = vmatpush1.bf16.msra.mxu0 %v267
    %291 = vmatprep.subr.bf16.mxu0 0
    %292 = vmatpush1.bf16.msra.mxu0 %v268
    %293 = vmatprep.subr.bf16.mxu0 0
    %294 = vmatpush1.bf16.msra.mxu0 0
    %295 = vmatprep.subr.bf16.mxu0 0
    %296 = vmatpush1.bf16.msra.mxu0 0
    %297 = vmatprep.subr.bf16.mxu0 0
    %298 = vmatpush1.bf16.msra.mxu0 0
    %299 = vmatprep.subr.bf16.mxu0 0
    %300 = vmatpush1.bf16.msra.mxu0 0
    %301 = vmatprep.subr.bf16.mxu0 0
    %302 = vmatpush1.bf16.msra.mxu0 0
    %303 = vmatprep.subr.bf16.mxu0 0
    %304 = vmatpush1.bf16.msra.mxu0 0
    %305 = vmatprep.subr.bf16.mxu0 0
    %306 = vmatpush1.bf16.msra.mxu0 0
    %307 = vmatprep.subr.bf16.mxu0 0
    %308 = vmatpush1.bf16.msra.mxu0 0
    %309 = vmatprep.mubr.bf16.mxu0 0
    %310 = vmatmul.mubr.bf16.gmra.mrb[0].mxu0 %v205
    %v311 = vpop.f32.mrb[0].mxu0
    %v312 = vadd.f32 %v227, %v311
    %v313 = vpop.f32.mrb[0].mxu0
    %v314 = vpop.f32.mrb[0].mxu0
    %v315 = vadd.f32 %v227, %v314
    %v316 = vpop.f32.mrb[0].mxu0
    %317 = vdwg.mxu0
    %v318 = vmax.f32 %v312, 0.0
    %v319 = vmax.f32 %v315, 0.0
    %v320 = vpack.c.bf16 %v319, %v318
    %v321 = vld [vmem:[#allocation8] sm:$0xf]
    %v322 = vld [vmem:[#allocation8 + $0x4] sm:$0xf]
    %v323 = vld [vmem:[#allocation8 + $0x8] sm:$0xf]
    %v324 = vld [vmem:[#allocation8 + $0xc] sm:$0xf]
    %v325 = vld [vmem:[#allocation8 + $0x10] sm:$0xf]
    %v326 = vld [vmem:[#allocation8 + $0x14] sm:$0xf]
    %v327 = vld [vmem:[#allocation8 + $0x18] sm:$0xf]
    %v328 = vld [vmem:[#allocation8 + $0x1c] sm:$0xf]
    %v329 = vld [vmem:[#allocation8 + $0x20] sm:$0xf]
    %v330 = vld [vmem:[#allocation8 + $0x24] sm:$0xf]
    %v331 = vld [vmem:[#allocation8 + $0x28] sm:$0xf]
    %v332 = vld [vmem:[#allocation8 + $0x2c] sm:$0xf]
    %v333 = vld [vmem:[#allocation8 + $0x30] sm:$0xf]
    %v334 = vld [vmem:[#allocation8 + $0x34] sm:$0xf]
    %v335 = vld [vmem:[#allocation8 + $0x38] sm:$0xf]
    %v336 = vld [vmem:[#allocation8 + $0x3c] sm:$0xf]
    %v337 = vld [vmem:[%s6] sm:$0x1]
    %v339 = vlaneseq
    %v340 = vshrl.u32 %v339, 7
    %v341 = vsub.s32 0, %v340
    %v342 = vrot.slane %v337, %v341
    %v360 = vunpack.c.l.b16 %v321
    %v361 = vunpack.c.l.b16 %v322
    %v362 = vunpack.c.l.b16 %v323
    %v363 = vunpack.c.l.b16 %v324
    %v364 = vunpack.c.l.b16 %v325
    %v365 = vunpack.c.l.b16 %v326
    %v366 = vunpack.c.l.b16 %v327
    %v367 = vunpack.c.l.b16 %v328
    %v368 = vunpack.c.l.b16 %v329
    %v369 = vunpack.c.l.b16 %v330
    %v370 = vunpack.c.l.b16 %v331
    %v371 = vunpack.c.l.b16 %v332
    %v372 = vunpack.c.l.b16 %v333
    %v373 = vunpack.c.l.b16 %v334
    %v374 = vunpack.c.l.b16 %v335
    %v375 = vunpack.c.l.b16 %v336
    %v376 = vpack.c.b16 %v361, %v360
    %v377 = vpack.c.b16 %v363, %v362
    %v378 = vpack.c.b16 %v365, %v364
    %v379 = vpack.c.b16 %v367, %v366
    %v380 = vpack.c.b16 %v369, %v368
    %v381 = vpack.c.b16 %v371, %v370
    %v382 = vpack.c.b16 %v373, %v372
    %v383 = vpack.c.b16 %v375, %v374
    %392 = vmatprep.subr.bf16.mxu0 0
    %393 = vmatpush1.bf16.msra.mxu0 %v376
    %394 = vmatprep.subr.bf16.mxu0 0
    %395 = vmatpush1.bf16.msra.mxu0 %v377
    %396 = vmatprep.subr.bf16.mxu0 0
    %397 = vmatpush1.bf16.msra.mxu0 %v378
    %398 = vmatprep.subr.bf16.mxu0 0
    %399 = vmatpush1.bf16.msra.mxu0 %v379
    %400 = vmatprep.subr.bf16.mxu0 0
    %401 = vmatpush1.bf16.msra.mxu0 %v380
    %402 = vmatprep.subr.bf16.mxu0 0
    %403 = vmatpush1.bf16.msra.mxu0 %v381
    %404 = vmatprep.subr.bf16.mxu0 0
    %405 = vmatpush1.bf16.msra.mxu0 %v382
    %406 = vmatprep.subr.bf16.mxu0 0
    %407 = vmatpush1.bf16.msra.mxu0 %v383
    %408 = vmatprep.subr.bf16.mxu0 0
    %409 = vmatpush1.bf16.msra.mxu0 0
    %410 = vmatprep.subr.bf16.mxu0 0
    %411 = vmatpush1.bf16.msra.mxu0 0
    %412 = vmatprep.subr.bf16.mxu0 0
    %413 = vmatpush1.bf16.msra.mxu0 0
    %414 = vmatprep.subr.bf16.mxu0 0
    %415 = vmatpush1.bf16.msra.mxu0 0
    %416 = vmatprep.subr.bf16.mxu0 0
    %417 = vmatpush1.bf16.msra.mxu0 0
    %418 = vmatprep.subr.bf16.mxu0 0
    %419 = vmatpush1.bf16.msra.mxu0 0
    %420 = vmatprep.subr.bf16.mxu0 0
    %421 = vmatpush1.bf16.msra.mxu0 0
    %422 = vmatprep.subr.bf16.mxu0 0
    %423 = vmatpush1.bf16.msra.mxu0 0
    %424 = vmatprep.mubr.bf16.mxu0 0
    %425 = vmatmul.mubr.bf16.gmra.mrb[0].mxu0 %v320
    %v426 = vpop.f32.mrb[0].mxu0
    %v427 = vadd.f32 %v342, %v426
    %v428 = vpop.f32.mrb[0].mxu0
    %v429 = vpop.f32.mrb[0].mxu0
    %v430 = vadd.f32 %v342, %v429
    %v431 = vpop.f32.mrb[0].mxu0
    %432 = vdwg.mxu0
    %v433 = vpack.c.bf16 %v430, %v427
    %v435 = vunpack.c.l.b16 %v433
    %v436 = vunpack.c.h.b16 %v433
    %v437 = vpack.c.b16 %v435, %v435
    %v438 = vpack.c.b16 %v436, %v436
    %441 = vst [vmem:[#allocation10] sm:$0xf] %v437
    %442 = vst [vmem:[#allocation10 + $0x4] sm:$0xf] %v438
    // Predicated region
    $region46: #{tpu_custom_call.1} parent=1 // pred_check
      _
    $region47: #{tpu_custom_call.1} parent=1 // pred_check_branch
      %444 = sbr.rel (0) target = $region49
    $region48: #{tpu_custom_call.1} parent=1 // pred_region
      %s446 = ssub.s32 128, 128
      %447 = vsyncadd [#allocation4], %s446
      %s448 = sshll.u32 [#allocation10], 4
      %s449 = int_to_ptr.vmem [resolvable:$true] %s448
      %454 = dma.vmem_to_hbm [thread:$0]  %s449, 128, %s7, [#allocation4], 64, 64, 4
    $region49: #{tpu_custom_call.1} parent=1 // pred_fallthru
      _
    // Predicated region
    $region50: #{tpu_custom_call.1} parent=1 // pred_check
      _
    $region51: #{tpu_custom_call.1} parent=1 // pred_check_branch
      %456 = sbr.rel (0) target = $region53
    $region52: #{tpu_custom_call.1} parent=1 // pred_region
      %457 = dma.done [#allocation4], 128
    $region53: #{tpu_custom_call.1} parent=1 // pred_fallthru
      _
    %458 = vsyncpa [#allocation3], 1
    %459 = vsyncpa [#allocation6], 1
    %460 = vsyncpa [#allocation9], 1
    %461 = vsyncpa [#allocation4], 1

// kernel: tpu_custom_call.1
$region0: #{tpu_custom_call.1}
  #allocation0 [shape = 'u32[]', space=smem, size = 0x4, offset = 0x4, fixed_abs, tag = 'smem constant byte address 0x4 - core index']
  #allocation1 [shape = 'u32[144,128]{1,0:T(1,128)}', space=vmem, size = 0x12000, scoped, tag = 'internal scratch']
  %s0 = inlined_call_operand.hbm [shape: bf16[16,128], index: 0, kind: input, shape index: {}]
  %s1 = inlined_call_operand.hbm [shape: bf16[128,128], index: 1, kind: input, shape index: {}]
  %s2 = inlined_call_operand.vmem [shape: f32[1,128], index: 2, kind: input, shape index: {}]
  %s3 = inlined_call_operand.hbm [shape: bf16[128,128], index: 3, kind: input, shape index: {}]
  %s4 = inlined_call_operand.vmem [shape: f32[1,128], index: 4, kind: input, shape index: {}]
  %s5 = inlined_call_operand.hbm [shape: bf16[128,128], index: 5, kind: input, shape index: {}]
  %s6 = inlined_call_operand.vmem [shape: f32[1,128], index: 6, kind: input, shape index: {}]
  %s7 = inlined_call_operand.hbm [shape: bf16[16,128], index: 7, kind: output, shape index: {}]
  %s8 = sld [smem:[#allocation0]]
  $region54: #{tpu_custom_call.1} parent=0
    _
  %s10 = ssub.s32 1, %s8
  %s11 = scalar_select 0, %s10, %s8
  $region1: #{tpu_custom_call.1} parent=0
    #allocation2 [shape = 'u8[4096]{0}', space=vmem, size = 0x1000, scoped, tag = 'input window, operand 0, single buffered']
    #allocation3 [shape = 's32[1]{0}', space=sflag, size = 0x4, scoped, tag = 'scoped memory for tpu_custom_call.1']
    #allocation4 [shape = 's32[1]{0}', space=sflag, size = 0x4, scoped, tag = 'scoped memory for tpu_custom_call.1']
    #allocation5 [shape = 'u8[32768]{0}', space=vmem, size = 0x8000, scoped, tag = 'input window, operand 1, single buffered']
    #allocation6 [shape = 's32[1]{0}', space=sflag, size = 0x4, scoped, tag = 'scoped memory for tpu_custom_call.1']
    #allocation7 [shape = 'u8[32768]{0}', space=vmem, size = 0x8000, scoped, tag = 'input window, operand 3, single buffered']
    #allocation8 [shape = 'u8[32768]{0}', space=vmem, size = 0x8000, scoped, tag = 'input window, operand 5, single buffered']
    #allocation9 [shape = 's32[1]{0}', space=sflag, size = 0x4, scoped, tag = 'scoped memory for tpu_custom_call.1']
    #allocation10 [shape = 'u8[4096]{0}', space=vmem, size = 0x1000, scoped, tag = 'output window, operand 0, single buffered']
    %12 = vsyncpa [#allocation3], 0
    %13 = vsyncpa [#allocation6], 0
    %14 = vsyncpa [#allocation9], 0
    %15 = vsyncpa [#allocation4], 0
    // Predicated region
    $region2: #{tpu_custom_call.1} parent=1 // pred_check
      _
    $region3: #{tpu_custom_call.1} parent=1 // pred_check_branch
      %17 = sbr.rel (0) target = $region5
    $region4: #{tpu_custom_call.1} parent=1 // pred_region
      %s19 = ssub.s32 128, 128
      %20 = vsyncadd [#allocation3], %s19
      %s21 = sshll.u32 [#allocation2], 4
      %s22 = int_to_ptr.vmem [resolvable:$true] %s21
      %27 = dma.hbm_to_vmem [thread:$0]  %s0, 128, %s22, [#allocation3], 64, 64, 4
    $region5: #{tpu_custom_call.1} parent=1 // pred_fallthru
      _
    // Predicated region
    $region6: #{tpu_custom_call.1} parent=1 // pred_check
      _
    $region7: #{tpu_custom_call.1} parent=1 // pred_check_branch
      %29 = sbr.rel (0) target = $region9
    $region8: #{tpu_custom_call.1} parent=1 // pred_region
      %s31 = ssub.s32 1024, 1024
      %32 = vsyncadd [#allocation6], %s31
      %s33 = sshll.u32 [#allocation5], 4
      %s34 = int_to_ptr.vmem [resolvable:$true] %s33
      %39 = dma.hbm_to_vmem [thread:$0]  %s1, 1024, %s34, [#allocation6], 64, 64, 4
    $region9: #{tpu_custom_call.1} parent=1 // pred_fallthru
      _
    // Predicated region
    $region10: #{tpu_custom_call.1} parent=1 // pred_check
      _
    $region11: #{tpu_custom_call.1} parent=1 // pred_check_branch
      %41 = sbr.rel (0) target = $region13
    $region12: #{tpu_custom_call.1} parent=1 // pred_region
      _
    $region13: #{tpu_custom_call.1} parent=1 // pred_fallthru
      _
    // Predicated region
    $region14: #{tpu_custom_call.1} parent=1 // pred_check
      _
    $region15: #{tpu_custom_call.1} parent=1 // pred_check_branch
      %43 = sbr.rel (0) target = $region17
    $region16: #{tpu_custom_call.1} parent=1 // pred_region
      %s45 = ssub.s32 1024, 1024
      %46 = vsyncadd [#allocation6], %s45
      %s47 = sshll.u32 [#allocation7], 4
      %s48 = int_to_ptr.vmem [resolvable:$true] %s47
      %53 = dma.hbm_to_vmem [thread:$0]  %s3, 1024, %s48, [#allocation6], 64, 64, 4
    $region17: #{tpu_custom_call.1} parent=1 // pred_fallthru
      _
    // Predicated region
    $region18: #{tpu_custom_call.1} parent=1 // pred_check
      _
    $region19: #{tpu_custom_call.1} parent=1 // pred_check_branch
      %55 = sbr.rel (0) target = $region21
    $region20: #{tpu_custom_call.1} parent=1 // pred_region
      _
    $region21: #{tpu_custom_call.1} parent=1 // pred_fallthru
      _
    // Predicated region
    $region22: #{tpu_custom_call.1} parent=1 // pred_check
      _
    $region23: #{tpu_custom_call.1} parent=1 // pred_check_branch
      %57 = sbr.rel (0) target = $region25
    $region24: #{tpu_custom_call.1} parent=1 // pred_region
      %s59 = ssub.s32 1024, 1024
      %60 = vsyncadd [#allocation9], %s59
      %s61 = sshll.u32 [#allocation8], 4
      %s62 = int_to_ptr.vmem [resolvable:$true] %s61
      %67 = dma.hbm_to_vmem [thread:$0]  %s5, 1024, %s62, [#allocation9], 64, 64, 4
    $region25: #{tpu_custom_call.1} parent=1 // pred_fallthru
      _
    // Predicated region
    $region26: #{tpu_custom_call.1} parent=1 // pred_check
      _
    $region27: #{tpu_custom_call.1} parent=1 // pred_check_branch
      %69 = sbr.rel (0) target = $region29
    $region28: #{tpu_custom_call.1} parent=1 // pred_region
      _
    $region29: #{tpu_custom_call.1} parent=1 // pred_fallthru
      _
    // Predicated region
    $region30: #{tpu_custom_call.1} parent=1 // pred_check
      _
    $region31: #{tpu_custom_call.1} parent=1 // pred_check_branch
      %71 = sbr.rel (0) target = $region33
    $region32: #{tpu_custom_call.1} parent=1 // pred_region
      %72 = dma.done [#allocation3], 128
    $region33: #{tpu_custom_call.1} parent=1 // pred_fallthru
      _
    // Predicated region
    $region34: #{tpu_custom_call.1} parent=1 // pred_check
      _
    $region35: #{tpu_custom_call.1} parent=1 // pred_check_branch
      %74 = sbr.rel (0) target = $region37
    $region36: #{tpu_custom_call.1} parent=1 // pred_region
      %75 = dma.done [#allocation6], 1024
    $region37: #{tpu_custom_call.1} parent=1 // pred_fallthru
      _
    // Predicated region
    $region38: #{tpu_custom_call.1} parent=1 // pred_check
      _
    $region39: #{tpu_custom_call.1} parent=1 // pred_check_branch
      %77 = sbr.rel (0) target = $region41
    $region40: #{tpu_custom_call.1} parent=1 // pred_region
      %78 = dma.done [#allocation6], 1024
    $region41: #{tpu_custom_call.1} parent=1 // pred_fallthru
      _
    // Predicated region
    $region42: #{tpu_custom_call.1} parent=1 // pred_check
      _
    $region43: #{tpu_custom_call.1} parent=1 // pred_check_branch
      %80 = sbr.rel (0) target = $region45
    $region44: #{tpu_custom_call.1} parent=1 // pred_region
      %81 = dma.done [#allocation9], 1024
    $region45: #{tpu_custom_call.1} parent=1 // pred_fallthru
      _
    %v83 = vld [vmem:[#allocation2] sm:$0xf]
    %v84 = vld [vmem:[#allocation2 + $0x4] sm:$0xf]
    %v85 = vld [vmem:[#allocation5] sm:$0xf]
    %v86 = vld [vmem:[#allocation5 + $0x4] sm:$0xf]
    %v87 = vld [vmem:[#allocation5 + $0x8] sm:$0xf]
    %v88 = vld [vmem:[#allocation5 + $0xc] sm:$0xf]
    %v89 = vld [vmem:[#allocation5 + $0x10] sm:$0xf]
    %v90 = vld [vmem:[#allocation5 + $0x14] sm:$0xf]
    %v91 = vld [vmem:[#allocation5 + $0x18] sm:$0xf]
    %v92 = vld [vmem:[#allocation5 + $0x1c] sm:$0xf]
    %v93 = vld [vmem:[#allocation5 + $0x20] sm:$0xf]
    %v94 = vld [vmem:[#allocation5 + $0x24] sm:$0xf]
    %v95 = vld [vmem:[#allocation5 + $0x28] sm:$0xf]
    %v96 = vld [vmem:[#allocation5 + $0x2c] sm:$0xf]
    %v97 = vld [vmem:[#allocation5 + $0x30] sm:$0xf]
    %v98 = vld [vmem:[#allocation5 + $0x34] sm:$0xf]
    %v99 = vld [vmem:[#allocation5 + $0x38] sm:$0xf]
    %v100 = vld [vmem:[#allocation5 + $0x3c] sm:$0xf]
    %v101 = vld [vmem:[%s2] sm:$0x1]
    %v103 = vlaneseq
    %v104 = vshrl.u32 %v103, 7
    %v105 = vsub.s32 0, %v104
    %v106 = vrot.slane %v101, %v105
    %v110 = vunpack.c.l.b16 %v83
    %v111 = vunpack.c.l.b16 %v84
    %v112 = vpack.c.b16 %v111, %v110
    %v130 = vunpack.c.l.b16 %v85
    %v131 = vunpack.c.l.b16 %v86
    %v132 = vunpack.c.l.b16 %v87
    %v133 = vunpack.c.l.b16 %v88
    %v134 = vunpack.c.l.b16 %v89
    %v135 = vunpack.c.l.b16 %v90
    %v136 = vunpack.c.l.b16 %v91
    %v137 = vunpack.c.l.b16 %v92
    %v138 = vunpack.c.l.b16 %v93
    %v139 = vunpack.c.l.b16 %v94
    %v140 = vunpack.c.l.b16 %v95
    %v141 = vunpack.c.l.b16 %v96
    %v142 = vunpack.c.l.b16 %v97
    %v143 = vunpack.c.l.b16 %v98
    %v144 = vunpack.c.l.b16 %v99
    %v145 = vunpack.c.l.b16 %v100
    %v146 = vpack.c.b16 %v131, %v130
    %v147 = vpack.c.b16 %v133, %v132
    %v148 = vpack.c.b16 %v135, %v134
    %v149 = vpack.c.b16 %v137, %v136
    %v150 = vpack.c.b16 %v139, %v138
    %v151 = vpack.c.b16 %v141, %v140
    %v152 = vpack.c.b16 %v143, %v142
    %v153 = vpack.c.b16 %v145, %v144
    %162 = vmatprep.subr.bf16.mxu0 0
    %163 = vmatpush1.bf16.msra.mxu0 %v146
    %164 = vmatprep.subr.bf16.mxu0 0
    %165 = vmatpush1.bf16.msra.mxu0 %v147
    %166 = vmatprep.subr.bf16.mxu0 0
    %167 = vmatpush1.bf16.msra.mxu0 %v148
    %168 = vmatprep.subr.bf16.mxu0 0
    %169 = vmatpush1.bf16.msra.mxu0 %v149
    %170 = vmatprep.subr.bf16.mxu0 0
    %171 = vmatpush1.bf16.msra.mxu0 %v150
    %172 = vmatprep.subr.bf16.mxu0 0
    %173 = vmatpush1.bf16.msra.mxu0 %v151
    %174 = vmatprep.subr.bf16.mxu0 0
    %175 = vmatpush1.bf16.msra.mxu0 %v152
    %176 = vmatprep.subr.bf16.mxu0 0
    %177 = vmatpush1.bf16.msra.mxu0 %v153
    %178 = vmatprep.subr.bf16.mxu0 0
    %179 = vmatpush1.bf16.msra.mxu0 0
    %180 = vmatprep.subr.bf16.mxu0 0
    %181 = vmatpush1.bf16.msra.mxu0 0
    %182 = vmatprep.subr.bf16.mxu0 0
    %183 = vmatpush1.bf16.msra.mxu0 0
    %184 = vmatprep.subr.bf16.mxu0 0
    %185 = vmatpush1.bf16.msra.mxu0 0
    %186 = vmatprep.subr.bf16.mxu0 0
    %187 = vmatpush1.bf16.msra.mxu0 0
    %188 = vmatprep.subr.bf16.mxu0 0
    %189 = vmatpush1.bf16.msra.mxu0 0
    %190 = vmatprep.subr.bf16.mxu0 0
    %191 = vmatpush1.bf16.msra.mxu0 0
    %192 = vmatprep.subr.bf16.mxu0 0
    %193 = vmatpush1.bf16.msra.mxu0 0
    %194 = vmatprep.mubr.bf16.mxu0 0
    %195 = vmatmul.mubr.bf16.gmra.mrb[0].mxu0 %v112
    %v196 = vpop.f32.mrb[0].mxu0
    %v197 = vadd.f32 %v106, %v196
    %v198 = vpop.f32.mrb[0].mxu0
    %v199 = vpop.f32.mrb[0].mxu0
    %v200 = vadd.f32 %v106, %v199
    %v201 = vpop.f32.mrb[0].mxu0
    %202 = vdwg.mxu0
    %v203 = vmax.f32 %v197, 0.0
    %v204 = vmax.f32 %v200, 0.0
    %v205 = vpack.c.bf16 %v204, %v203
    %v206 = vld [vmem:[#allocation7] sm:$0xf]
    %v207 = vld [vmem:[#allocation7 + $0x4] sm:$0xf]
    %v208 = vld [vmem:[#allocation7 + $0x8] sm:$0xf]
    %v209 = vld [vmem:[#allocation7 + $0xc] sm:$0xf]
    %v210 = vld [vmem:[#allocation7 + $0x10] sm:$0xf]
    %v211 = vld [vmem:[#allocation7 + $0x14] sm:$0xf]
    %v212 = vld [vmem:[#allocation7 + $0x18] sm:$0xf]
    %v213 = vld [vmem:[#allocation7 + $0x1c] sm:$0xf]
    %v214 = vld [vmem:[#allocation7 + $0x20] sm:$0xf]
    %v215 = vld [vmem:[#allocation7 + $0x24] sm:$0xf]
    %v216 = vld [vmem:[#allocation7 + $0x28] sm:$0xf]
    %v217 = vld [vmem:[#allocation7 + $0x2c] sm:$0xf]
    %v218 = vld [vmem:[#allocation7 + $0x30] sm:$0xf]
    %v219 = vld [vmem:[#allocation7 + $0x34] sm:$0xf]
    %v220 = vld [vmem:[#allocation7 + $0x38] sm:$0xf]
    %v221 = vld [vmem:[#allocation7 + $0x3c] sm:$0xf]
    %v222 = vld [vmem:[%s4] sm:$0x1]
    %v224 = vlaneseq
    %v225 = vshrl.u32 %v224, 7
    %v226 = vsub.s32 0, %v225
    %v227 = vrot.slane %v222, %v226
    %v245 = vunpack.c.l.b16 %v206
    %v246 = vunpack.c.l.b16 %v207
    %v247 = vunpack.c.l.b16 %v208
    %v248 = vunpack.c.l.b16 %v209
    %v249 = vunpack.c.l.b16 %v210
    %v250 = vunpack.c.l.b16 %v211
    %v251 = vunpack.c.l.b16 %v212
    %v252 = vunpack.c.l.b16 %v213
    %v253 = vunpack.c.l.b16 %v214
    %v254 = vunpack.c.l.b16 %v215
    %v255 = vunpack.c.l.b16 %v216
    %v256 = vunpack.c.l.b16 %v217
    %v257 = vunpack.c.l.b16 %v218
    %v258 = vunpack.c.l.b16 %v219
    %v259 = vunpack.c.l.b16 %v220
    %v260 = vunpack.c.l.b16 %v221
    %v261 = vpack.c.b16 %v246, %v245
    %v262 = vpack.c.b16 %v248, %v247
    %v263 = vpack.c.b16 %v250, %v249
    %v264 = vpack.c.b16 %v252, %v251
    %v265 = vpack.c.b16 %v254, %v253
    %v266 = vpack.c.b16 %v256, %v255
    %v267 = vpack.c.b16 %v258, %v257
    %v268 = vpack.c.b16 %v260, %v259
    %277 = vmatprep.subr.bf16.mxu0 0
    %278 = vmatpush1.bf16.msra.mxu0 %v261
    %279 = vmatprep.subr.bf16.mxu0 0
    %280 = vmatpush1.bf16.msra.mxu0 %v262
    %281 = vmatprep.subr.bf16.mxu0 0
    %282 = vmatpush1.bf16.msra.mxu0 %v263
    %283 = vmatprep.subr.bf16.mxu0 0
    %284 = vmatpush1.bf16.msra.mxu0 %v264
    %285 = vmatprep.subr.bf16.mxu0 0
    %286 = vmatpush1.bf16.msra.mxu0 %v265
    %287 = vmatprep.subr.bf16.mxu0 0
    %288 = vmatpush1.bf16.msra.mxu0 %v266
    %289 = vmatprep.subr.bf16.mxu0 0
    %290 = vmatpush1.bf16.msra.mxu0 %v267
    %291 = vmatprep.subr.bf16.mxu0 0
    %292 = vmatpush1.bf16.msra.mxu0 %v268
    %293 = vmatprep.subr.bf16.mxu0 0
    %294 = vmatpush1.bf16.msra.mxu0 0
    %295 = vmatprep.subr.bf16.mxu0 0
    %296 = vmatpush1.bf16.msra.mxu0 0
    %297 = vmatprep.subr.bf16.mxu0 0
    %298 = vmatpush1.bf16.msra.mxu0 0
    %299 = vmatprep.subr.bf16.mxu0 0
    %300 = vmatpush1.bf16.msra.mxu0 0
    %301 = vmatprep.subr.bf16.mxu0 0
    %302 = vmatpush1.bf16.msra.mxu0 0
    %303 = vmatprep.subr.bf16.mxu0 0
    %304 = vmatpush1.bf16.msra.mxu0 0
    %305 = vmatprep.subr.bf16.mxu0 0
    %306 = vmatpush1.bf16.msra.mxu0 0
    %307 = vmatprep.subr.bf16.mxu0 0
    %308 = vmatpush1.bf16.msra.mxu0 0
    %309 = vmatprep.mubr.bf16.mxu0 0
    %310 = vmatmul.mubr.bf16.gmra.mrb[0].mxu0 %v205
    %v311 = vpop.f32.mrb[0].mxu0
    %v312 = vadd.f32 %v227, %v311
    %v313 = vpop.f32.mrb[0].mxu0
    %v314 = vpop.f32.mrb[0].mxu0
    %v315 = vadd.f32 %v227, %v314
    %v316 = vpop.f32.mrb[0].mxu0
    %317 = vdwg.mxu0
    %v318 = vmax.f32 %v312, 0.0
    %v319 = vmax.f32 %v315, 0.0
    %v320 = vpack.c.bf16 %v319, %v318
    %v321 = vld [vmem:[#allocation8] sm:$0xf]
    %v322 = vld [vmem:[#allocation8 + $0x4] sm:$0xf]
    %v323 = vld [vmem:[#allocation8 + $0x8] sm:$0xf]
    %v324 = vld [vmem:[#allocation8 + $0xc] sm:$0xf]
    %v325 = vld [vmem:[#allocation8 + $0x10] sm:$0xf]
    %v326 = vld [vmem:[#allocation8 + $0x14] sm:$0xf]
    %v327 = vld [vmem:[#allocation8 + $0x18] sm:$0xf]
    %v328 = vld [vmem:[#allocation8 + $0x1c] sm:$0xf]
    %v329 = vld [vmem:[#allocation8 + $0x20] sm:$0xf]
    %v330 = vld [vmem:[#allocation8 + $0x24] sm:$0xf]
    %v331 = vld [vmem:[#allocation8 + $0x28] sm:$0xf]
    %v332 = vld [vmem:[#allocation8 + $0x2c] sm:$0xf]
    %v333 = vld [vmem:[#allocation8 + $0x30] sm:$0xf]
    %v334 = vld [vmem:[#allocation8 + $0x34] sm:$0xf]
    %v335 = vld [vmem:[#allocation8 + $0x38] sm:$0xf]
    %v336 = vld [vmem:[#allocation8 + $0x3c] sm:$0xf]
    %v337 = vld [vmem:[%s6] sm:$0x1]
    %v339 = vlaneseq
    %v340 = vshrl.u32 %v339, 7
    %v341 = vsub.s32 0, %v340
    %v342 = vrot.slane %v337, %v341
    %v360 = vunpack.c.l.b16 %v321
    %v361 = vunpack.c.l.b16 %v322
    %v362 = vunpack.c.l.b16 %v323
    %v363 = vunpack.c.l.b16 %v324
    %v364 = vunpack.c.l.b16 %v325
    %v365 = vunpack.c.l.b16 %v326
    %v366 = vunpack.c.l.b16 %v327
    %v367 = vunpack.c.l.b16 %v328
    %v368 = vunpack.c.l.b16 %v329
    %v369 = vunpack.c.l.b16 %v330
    %v370 = vunpack.c.l.b16 %v331
    %v371 = vunpack.c.l.b16 %v332
    %v372 = vunpack.c.l.b16 %v333
    %v373 = vunpack.c.l.b16 %v334
    %v374 = vunpack.c.l.b16 %v335
    %v375 = vunpack.c.l.b16 %v336
    %v376 = vpack.c.b16 %v361, %v360
    %v377 = vpack.c.b16 %v363, %v362
    %v378 = vpack.c.b16 %v365, %v364
    %v379 = vpack.c.b16 %v367, %v366
    %v380 = vpack.c.b16 %v369, %v368
    %v381 = vpack.c.b16 %v371, %v370
    %v382 = vpack.c.b16 %v373, %v372
    %v383 = vpack.c.b16 %v375, %v374
    %392 = vmatprep.subr.bf16.mxu0 0
    %393 = vmatpush1.bf16.msra.mxu0 %v376
    %394 = vmatprep.subr.bf16.mxu0 0
    %395 = vmatpush1.bf16.msra.mxu0 %v377
    %396 = vmatprep.subr.bf16.mxu0 0
    %397 = vmatpush1.bf16.msra.mxu0 %v378
    %398 = vmatprep.subr.bf16.mxu0 0
    %399 = vmatpush1.bf16.msra.mxu0 %v379
    %400 = vmatprep.subr.bf16.mxu0 0
    %401 = vmatpush1.bf16.msra.mxu0 %v380
    %402 = vmatprep.subr.bf16.mxu0 0
    %403 = vmatpush1.bf16.msra.mxu0 %v381
    %404 = vmatprep.subr.bf16.mxu0 0
    %405 = vmatpush1.bf16.msra.mxu0 %v382
    %406 = vmatprep.subr.bf16.mxu0 0
    %407 = vmatpush1.bf16.msra.mxu0 %v383
    %408 = vmatprep.subr.bf16.mxu0 0
    %409 = vmatpush1.bf16.msra.mxu0 0
    %410 = vmatprep.subr.bf16.mxu0 0
    %411 = vmatpush1.bf16.msra.mxu0 0
    %412 = vmatprep.subr.bf16.mxu0 0
    %413 = vmatpush1.bf16.msra.mxu0 0
    %414 = vmatprep.subr.bf16.mxu0 0
    %415 = vmatpush1.bf16.msra.mxu0 0
    %416 = vmatprep.subr.bf16.mxu0 0
    %417 = vmatpush1.bf16.msra.mxu0 0
    %418 = vmatprep.subr.bf16.mxu0 0
    %419 = vmatpush1.bf16.msra.mxu0 0
    %420 = vmatprep.subr.bf16.mxu0 0
    %421 = vmatpush1.bf16.msra.mxu0 0
    %422 = vmatprep.subr.bf16.mxu0 0
    %423 = vmatpush1.bf16.msra.mxu0 0
    %424 = vmatprep.mubr.bf16.mxu0 0
    %425 = vmatmul.mubr.bf16.gmra.mrb[0].mxu0 %v320
    %v426 = vpop.f32.mrb[0].mxu0
    %v427 = vadd.f32 %v342, %v426
    %v428 = vpop.f32.mrb[0].mxu0
    %v429 = vpop.f32.mrb[0].mxu0
    %v430 = vadd.f32 %v342, %v429
    %v431 = vpop.f32.mrb[0].mxu0
    %432 = vdwg.mxu0
    %v433 = vpack.c.bf16 %v430, %v427
    %v435 = vunpack.c.l.b16 %v433
    %v436 = vunpack.c.h.b16 %v433
    %v437 = vpack.c.b16 %v435, %v435
    %v438 = vpack.c.b16 %v436, %v436
    %441 = vst [vmem:[#allocation10] sm:$0xf] %v437
    %442 = vst [vmem:[#allocation10 + $0x4] sm:$0xf] %v438
    // Predicated region
    $region46: #{tpu_custom_call.1} parent=1 // pred_check
      _
    $region47: #{tpu_custom_call.1} parent=1 // pred_check_branch
      %444 = sbr.rel (0) target = $region49
    $region48: #{tpu_custom_call.1} parent=1 // pred_region
      %s446 = ssub.s32 128, 128
      %447 = vsyncadd [#allocation4], %s446
      %s448 = sshll.u32 [#allocation10], 4
      %s449 = int_to_ptr.vmem [resolvable:$true] %s448
      %454 = dma.vmem_to_hbm [thread:$0]  %s449, 128, %s7, [#allocation4], 64, 64, 4
    $region49: #{tpu_custom_call.1} parent=1 // pred_fallthru
      _
    // Predicated region
    $region50: #{tpu_custom_call.1} parent=1 // pred_check
      _
    $region51: #{tpu_custom_call.1} parent=1 // pred_check_branch
      %456 = sbr.rel (0) target = $region53
    $region52: #{tpu_custom_call.1} parent=1 // pred_region
      %457 = dma.done [#allocation4], 128
    $region53: #{tpu_custom_call.1} parent=1 // pred_fallthru
      _
    %458 = vsyncpa [#allocation3], 1
    %459 = vsyncpa [#allocation6], 1
    %460 = vsyncpa [#allocation9], 1
    %461 = vsyncpa [#allocation4], 1

</llo_original>
